<compile_context>
chip_gen: v7x
topology: tpu7x:2x2x1
jax: 0.10.0
libtpu: 0.0.40
codegen_flags: <defaults>
</compile_context>

<pallas_src>
import functools
import numpy as np
import jax
import jax.numpy as jnp
from jax.experimental import pallas as pl
from jax.experimental.pallas import tpu as pltpu

VMEM_SPEC = pl.BlockSpec(memory_space=pltpu.MemorySpace.VMEM)
LANE = 128


# ------------------------------ fused kernel --------------------------------

def _fused_forward_kernel(eli_ref, xu_ref, mx_ref, mw_ref, mb_ref, memb_ref,
                          adj_u2m_ref, adj_m2u_ref,
                          w1r_ref, b1r_ref, w1v_ref, b1v_ref,
                          w2r_ref, b2r_ref, w2v_ref, b2v_ref,
                          out_ref):
    f32 = jnp.float32

    # ---- encoders (movie: Linear(x) + bias + Embedding; user: Embedding) ----
    x_user = xu_ref[...]                                                   # [NU, H]
    x_movie = (jnp.dot(mx_ref[...], mw_ref[...], preferred_element_type=f32)
               + mb_ref[...] + memb_ref[...])                              # [NM, H]

    adj_u2m = adj_u2m_ref[...]   # movie <- user   [NM, NU]
    adj_m2u = adj_m2u_ref[...]   # user  <- movie  [NU, NM]

    # ---- SAGEConv with merged W_l / W_r matmul: [agg | x_dst] @ [W_l ; W_r] ----
    def sage(adj, x_src, x_dst, w_stack, b, relu):
        agg = jnp.dot(adj, x_src, preferred_element_type=f32)              # [Nd, H]
        cat = jnp.concatenate([agg, x_dst], axis=-1)                       # [Nd, 2H]
        out = jnp.dot(cat, w_stack, preferred_element_type=f32) + b        # [Nd, H]
        return jnp.maximum(out, 0.0) if relu else out

    # layer 1 (ReLU)
    u1 = sage(adj_m2u, x_movie, x_user, w1v_ref[...], b1v_ref[...], True)
    m1 = sage(adj_u2m, x_user, x_movie, w1r_ref[...], b1r_ref[...], True)
    # layer 2 (no ReLU)
    u2 = sage(adj_m2u, m1, u1, w2v_ref[...], b2v_ref[...], False)
    m2 = sage(adj_u2m, u1, m1, w2r_ref[...], b2r_ref[...], False)

    # ---- classifier: pred[e] = <u2[eli0[e]], m2[eli1[e]]>, lane-dense output ----
    eli = eli_ref[...]                                                     # [2, E_pad] i32
    n_user, _ = u2.shape
    n_movie, _ = m2.shape
    e_pad = eli.shape[1]
    sel_u = (jax.lax.broadcasted_iota(jnp.int32, (n_user, e_pad), 0)
             == eli[0:1, :]).astype(f32)                                   # [NU, E_pad]
    sel_m = (jax.lax.broadcasted_iota(jnp.int32, (n_movie, e_pad), 0)
             == eli[1:2, :]).astype(f32)                                   # [NM, E_pad]

    d = jnp.dot(u2, m2.T, preferred_element_type=f32)                      # [NU, NM]
    t = jnp.dot(d, sel_m, preferred_element_type=f32)                      # [NU, E_pad]
    out_ref[...] = jnp.sum(sel_u * t, axis=0, keepdims=True)               # [1, E_pad]


# ------------------------------ model forward -------------------------------

def model_forward(params, user_node_id, movie_x, movie_node_id,
                  adj_u2m, adj_m2u, edge_label_index):
    # embedding lookups are glue (single trivial gathers); everything else is fused
    x_user = params["user_emb"][user_node_id]                 # [NU, H]
    m_emb = params["movie_emb"][movie_node_id]                # [NM, H]

    num_edges = edge_label_index.shape[1]
    e_pad = max(LANE, ((num_edges + LANE - 1) // LANE) * LANE)
    eli_pad = jnp.zeros((2, e_pad), jnp.int32).at[:, :num_edges].set(
        edge_label_index.astype(jnp.int32))

    def stack(p):  # (W_l [H,H], b_l [H], W_r [H,H]) -> ([2H,H], [1,H])
        w_l, b_l, w_r = p
        return jnp.concatenate([w_l, w_r], axis=0), b_l.reshape(1, -1)

    w1r, b1r = stack(params["conv1_rates"])
    w1v, b1v = stack(params["conv1_rev"])
    w2r, b2r = stack(params["conv2_rates"])
    w2v, b2v = stack(params["conv2_rev"])

    out = pl.pallas_call(
        _fused_forward_kernel,
        out_shape=jax.ShapeDtypeStruct((1, e_pad), jnp.float32),
        in_specs=[VMEM_SPEC] * 16,
        out_specs=VMEM_SPEC,
    )(eli_pad, x_user, movie_x,
      params["movie_lin_w"], params["movie_lin_b"].reshape(1, -1), m_emb,
      adj_u2m, adj_m2u,
      w1r, b1r, w1v, b1v, w2r, b2r, w2v, b2v)

    return out[0, :num_edges]


# ----------------------------- pure-JAX reference ---------------------------

def reference_forward(params, user_node_id, movie_x, movie_node_id,
                      adj_u2m, adj_m2u, edge_label_index):
    def sage(adj, xs, xd, wl, bl, wr, relu):
        out = (adj @ xs) @ wl + bl + xd @ wr
        return jnp.maximum(out, 0.0) if relu else out

    x_user = params["user_emb"][user_node_id]
    x_movie = movie_x @ params["movie_lin_w"] + params["movie_lin_b"] + \
        params["movie_emb"][movie_node_id]
    u1 = sage(adj_m2u, x_movie, x_user, *params["conv1_rev"], True)
    m1 = sage(adj_u2m, x_user, x_movie, *params["conv1_rates"], True)
    u2 = sage(adj_m2u, m1, u1, *params["conv2_rev"], False)
    m2 = sage(adj_u2m, u1, m1, *params["conv2_rates"], False)
    return (u2[edge_label_index[0]] * m2[edge_label_index[1]]).sum(-1)


# --------------------------------- helpers ----------------------------------

def mean_adjacency(dst_idx, src_idx, n_dst, n_src):
    """Dense row-normalized adjacency (mean aggregation; zero-degree rows -> 0)."""
    a = jnp.zeros((n_dst, n_src), jnp.float32).at[dst_idx, src_idx].add(1.0)
    deg = a.sum(axis=1, keepdims=True)
    return a / jnp.maximum(deg, 1.0)


def init_params(key, hidden, num_users, num_movies, movie_feat_dim):
    ks = jax.random.split(key, 16)
    ki = iter(ks)

    def lin(k, fan_in, fan_out):
        return jax.random.normal(k, (fan_in, fan_out), jnp.float32) / np.sqrt(fan_in)

    def sage_params(k1, k2, k3):
        return (lin(k1, hidden, hidden),                                # W_l  [in, out]
                jax.random.normal(k2, (hidden,), jnp.float32) * 0.01,   # b_l
                lin(k3, hidden, hidden))                                # W_r (no bias)

    return {
        "user_emb": jax.random.normal(next(ki), (num_users, hidden), jnp.float32),
        "movie_emb": jax.random.normal(next(ki), (num_movies, hidden), jnp.float32),
        "movie_lin_w": lin(next(ki), movie_feat_dim, hidden),
        "movie_lin_b": jax.random.normal(next(ki), (hidden,), jnp.float32) * 0.01,
        "conv1_rates": sage_params(next(ki), next(ki), next(ki)),
        "conv1_rev": sage_params(next(ki), next(ki), next(ki)),
        "conv2_rates": sage_params(next(ki), next(ki), next(ki)),
        "conv2_rev": sage_params(next(ki), next(ki), next(ki)),
    }


if __name__ == "__main__":
    HIDDEN = 32
    NUM_USERS = 16
    NUM_MOVIES = 24
    MOVIE_FEAT = 20
    NUM_MSG_EDGES = 64
    NUM_LABEL_EDGES = 8

    key = jax.random.PRNGKey(0)
    k_par, k_mx, k_eu, k_em, k_lu, k_lm = jax.random.split(key, 6)

    params = init_params(k_par, HIDDEN, NUM_USERS, NUM_MOVIES, MOVIE_FEAT)

    # synthetic deterministic graph data
    movie_x = jax.random.normal(k_mx, (NUM_MOVIES, MOVIE_FEAT), jnp.float32)
    user_node_id = jnp.arange(NUM_USERS)
    movie_node_id = jnp.arange(NUM_MOVIES)

    msg_u = jax.random.randint(k_eu, (NUM_MSG_EDGES,), 0, NUM_USERS)
    msg_m = jax.random.randint(k_em, (NUM_MSG_EDGES,), 0, NUM_MOVIES)
    # ('user','rates','movie') edges and their ToUndirected reverse
    adj_u2m = mean_adjacency(msg_m, msg_u, NUM_MOVIES, NUM_USERS)   # movie <- user
    adj_m2u = mean_adjacency(msg_u, msg_m, NUM_USERS, NUM_MOVIES)   # user  <- movie

    edge_label_index = jnp.stack([
        jax.random.randint(k_lu, (NUM_LABEL_EDGES,), 0, NUM_USERS),
        jax.random.randint(k_lm, (NUM_LABEL_EDGES,), 0, NUM_MOVIES),
    ], axis=0)

    pred = model_forward(params, user_node_id, movie_x, movie_node_id,
                         adj_u2m, adj_m2u, edge_label_index)
    pred = jax.block_until_ready(pred)

    ref = reference_forward(params, user_node_id, movie_x, movie_node_id,
                            adj_u2m, adj_m2u, edge_label_index)
    assert pred.shape == (NUM_LABEL_EDGES,)
    np.testing.assert_allclose(np.asarray(pred), np.asarray(ref), rtol=1e-4, atol=1e-4)

    print("KERNEL_OK")
</pallas_src>

<mosaic_0001>
module attributes {stable_mosaic.version = 11 : i64} {
  func.func @_fused_forward_kernel(%arg0: memref<2x128xi32, #tpu.memory_space<vmem>>, %arg1: memref<16x32xf32, #tpu.memory_space<vmem>>, %arg2: memref<24x20xf32, #tpu.memory_space<vmem>>, %arg3: memref<20x32xf32, #tpu.memory_space<vmem>>, %arg4: memref<1x32xf32, #tpu.memory_space<vmem>>, %arg5: memref<24x32xf32, #tpu.memory_space<vmem>>, %arg6: memref<24x16xf32, #tpu.memory_space<vmem>>, %arg7: memref<16x24xf32, #tpu.memory_space<vmem>>, %arg8: memref<64x32xf32, #tpu.memory_space<vmem>>, %arg9: memref<1x32xf32, #tpu.memory_space<vmem>>, %arg10: memref<64x32xf32, #tpu.memory_space<vmem>>, %arg11: memref<1x32xf32, #tpu.memory_space<vmem>>, %arg12: memref<64x32xf32, #tpu.memory_space<vmem>>, %arg13: memref<1x32xf32, #tpu.memory_space<vmem>>, %arg14: memref<64x32xf32, #tpu.memory_space<vmem>>, %arg15: memref<1x32xf32, #tpu.memory_space<vmem>>, %arg16: memref<1x128xf32, #tpu.memory_space<vmem>>) attributes {dimension_semantics = [], scalar_prefetch = 0 : i64, scratch_operands = 0 : i64, tpu.core_type = #tpu.core_type<tc>} {
    %c0 = arith.constant 0 : index
    %c0_0 = arith.constant 0 : index
    %0 = vector.load %arg1[%c0, %c0_0] : memref<16x32xf32, #tpu.memory_space<vmem>>, vector<16x32xf32>
    %c0_1 = arith.constant 0 : index
    %c0_2 = arith.constant 0 : index
    %1 = vector.load %arg2[%c0_1, %c0_2] : memref<24x20xf32, #tpu.memory_space<vmem>>, vector<24x20xf32>
    %c0_3 = arith.constant 0 : index
    %c0_4 = arith.constant 0 : index
    %2 = vector.load %arg3[%c0_3, %c0_4] : memref<20x32xf32, #tpu.memory_space<vmem>>, vector<20x32xf32>
    %cst = arith.constant dense<0.000000e+00> : vector<24x32xf32>
    %3 = tpu.matmul %1, %2, %cst {dimension_numbers = #tpu.dot_dimension_numbers<[1], [0], [0], [1], [0, 0, 1, 1], [], []>} : vector<24x20xf32>, vector<20x32xf32>, vector<24x32xf32> -> vector<24x32xf32>
    %c0_5 = arith.constant 0 : index
    %c0_6 = arith.constant 0 : index
    %4 = vector.load %arg4[%c0_5, %c0_6] : memref<1x32xf32, #tpu.memory_space<vmem>>, vector<1x32xf32>
    %5 = vector.broadcast %4 : vector<1x32xf32> to vector<24x32xf32>
    %6 = arith.addf %3, %5 : vector<24x32xf32>
    %c0_7 = arith.constant 0 : index
    %c0_8 = arith.constant 0 : index
    %7 = vector.load %arg5[%c0_7, %c0_8] : memref<24x32xf32, #tpu.memory_space<vmem>>, vector<24x32xf32>
    %8 = arith.addf %6, %7 : vector<24x32xf32>
    %c0_9 = arith.constant 0 : index
    %c0_10 = arith.constant 0 : index
    %9 = vector.load %arg6[%c0_9, %c0_10] : memref<24x16xf32, #tpu.memory_space<vmem>>, vector<24x16xf32>
    %c0_11 = arith.constant 0 : index
    %c0_12 = arith.constant 0 : index
    %10 = vector.load %arg7[%c0_11, %c0_12] : memref<16x24xf32, #tpu.memory_space<vmem>>, vector<16x24xf32>
    %c0_13 = arith.constant 0 : index
    %c0_14 = arith.constant 0 : index
    %11 = vector.load %arg10[%c0_13, %c0_14] : memref<64x32xf32, #tpu.memory_space<vmem>>, vector<64x32xf32>
    %c0_15 = arith.constant 0 : index
    %c0_16 = arith.constant 0 : index
    %12 = vector.load %arg11[%c0_15, %c0_16] : memref<1x32xf32, #tpu.memory_space<vmem>>, vector<1x32xf32>
    %cst_17 = arith.constant dense<0.000000e+00> : vector<16x32xf32>
    %13 = tpu.matmul %10, %8, %cst_17 {dimension_numbers = #tpu.dot_dimension_numbers<[1], [0], [0], [1], [0, 0, 1, 1], [], []>} : vector<16x24xf32>, vector<24x32xf32>, vector<16x32xf32> -> vector<16x32xf32>
    %14 = tpu.concatenate %13, %0 in 1 : vector<16x32xf32>, vector<16x32xf32> -> vector<16x64xf32>
    %cst_18 = arith.constant dense<0.000000e+00> : vector<16x32xf32>
    %15 = tpu.matmul %14, %11, %cst_18 {dimension_numbers = #tpu.dot_dimension_numbers<[1], [0], [0], [1], [0, 0, 1, 1], [], []>} : vector<16x64xf32>, vector<64x32xf32>, vector<16x32xf32> -> vector<16x32xf32>
    %16 = vector.broadcast %12 : vector<1x32xf32> to vector<16x32xf32>
    %17 = arith.addf %15, %16 : vector<16x32xf32>
    %cst_19 = arith.constant 0.000000e+00 : f32
    %18 = vector.broadcast %cst_19 : f32 to vector<16x32xf32>
    %19 = arith.maximumf %17, %18 : vector<16x32xf32>
    %c0_20 = arith.constant 0 : index
    %c0_21 = arith.constant 0 : index
    %20 = vector.load %arg8[%c0_20, %c0_21] : memref<64x32xf32, #tpu.memory_space<vmem>>, vector<64x32xf32>
    %c0_22 = arith.constant 0 : index
    %c0_23 = arith.constant 0 : index
    %21 = vector.load %arg9[%c0_22, %c0_23] : memref<1x32xf32, #tpu.memory_space<vmem>>, vector<1x32xf32>
    %cst_24 = arith.constant dense<0.000000e+00> : vector<24x32xf32>
    %22 = tpu.matmul %9, %0, %cst_24 {dimension_numbers = #tpu.dot_dimension_numbers<[1], [0], [0], [1], [0, 0, 1, 1], [], []>} : vector<24x16xf32>, vector<16x32xf32>, vector<24x32xf32> -> vector<24x32xf32>
    %23 = tpu.concatenate %22, %8 in 1 : vector<24x32xf32>, vector<24x32xf32> -> vector<24x64xf32>
    %cst_25 = arith.constant dense<0.000000e+00> : vector<24x32xf32>
    %24 = tpu.matmul %23, %20, %cst_25 {dimension_numbers = #tpu.dot_dimension_numbers<[1], [0], [0], [1], [0, 0, 1, 1], [], []>} : vector<24x64xf32>, vector<64x32xf32>, vector<24x32xf32> -> vector<24x32xf32>
    %25 = vector.broadcast %21 : vector<1x32xf32> to vector<24x32xf32>
    %26 = arith.addf %24, %25 : vector<24x32xf32>
    %cst_26 = arith.constant 0.000000e+00 : f32
    %27 = vector.broadcast %cst_26 : f32 to vector<24x32xf32>
    %28 = arith.maximumf %26, %27 : vector<24x32xf32>
    %c0_27 = arith.constant 0 : index
    %c0_28 = arith.constant 0 : index
    %29 = vector.load %arg14[%c0_27, %c0_28] : memref<64x32xf32, #tpu.memory_space<vmem>>, vector<64x32xf32>
    %c0_29 = arith.constant 0 : index
    %c0_30 = arith.constant 0 : index
    %30 = vector.load %arg15[%c0_29, %c0_30] : memref<1x32xf32, #tpu.memory_space<vmem>>, vector<1x32xf32>
    %cst_31 = arith.constant dense<0.000000e+00> : vector<16x32xf32>
    %31 = tpu.matmul %10, %28, %cst_31 {dimension_numbers = #tpu.dot_dimension_numbers<[1], [0], [0], [1], [0, 0, 1, 1], [], []>} : vector<16x24xf32>, vector<24x32xf32>, vector<16x32xf32> -> vector<16x32xf32>
    %32 = tpu.concatenate %31, %19 in 1 : vector<16x32xf32>, vector<16x32xf32> -> vector<16x64xf32>
    %cst_32 = arith.constant dense<0.000000e+00> : vector<16x32xf32>
    %33 = tpu.matmul %32, %29, %cst_32 {dimension_numbers = #tpu.dot_dimension_numbers<[1], [0], [0], [1], [0, 0, 1, 1], [], []>} : vector<16x64xf32>, vector<64x32xf32>, vector<16x32xf32> -> vector<16x32xf32>
    %34 = vector.broadcast %30 : vector<1x32xf32> to vector<16x32xf32>
    %35 = arith.addf %33, %34 : vector<16x32xf32>
    %c0_33 = arith.constant 0 : index
    %c0_34 = arith.constant 0 : index
    %36 = vector.load %arg12[%c0_33, %c0_34] : memref<64x32xf32, #tpu.memory_space<vmem>>, vector<64x32xf32>
    %c0_35 = arith.constant 0 : index
    %c0_36 = arith.constant 0 : index
    %37 = vector.load %arg13[%c0_35, %c0_36] : memref<1x32xf32, #tpu.memory_space<vmem>>, vector<1x32xf32>
    %cst_37 = arith.constant dense<0.000000e+00> : vector<24x32xf32>
    %38 = tpu.matmul %9, %19, %cst_37 {dimension_numbers = #tpu.dot_dimension_numbers<[1], [0], [0], [1], [0, 0, 1, 1], [], []>} : vector<24x16xf32>, vector<16x32xf32>, vector<24x32xf32> -> vector<24x32xf32>
    %39 = tpu.concatenate %38, %28 in 1 : vector<24x32xf32>, vector<24x32xf32> -> vector<24x64xf32>
    %cst_38 = arith.constant dense<0.000000e+00> : vector<24x32xf32>
    %40 = tpu.matmul %39, %36, %cst_38 {dimension_numbers = #tpu.dot_dimension_numbers<[1], [0], [0], [1], [0, 0, 1, 1], [], []>} : vector<24x64xf32>, vector<64x32xf32>, vector<24x32xf32> -> vector<24x32xf32>
    %41 = vector.broadcast %37 : vector<1x32xf32> to vector<24x32xf32>
    %42 = arith.addf %40, %41 : vector<24x32xf32>
    %c0_39 = arith.constant 0 : index
    %c0_40 = arith.constant 0 : index
    %43 = vector.load %arg0[%c0_39, %c0_40] : memref<2x128xi32, #tpu.memory_space<vmem>>, vector<2x128xi32>
    %44 = tpu.iota {dimensions = array<i32: 0>} : vector<16x128xi32>
    %45 = vector.extract_strided_slice %43 {offsets = [0, 0], sizes = [1, 128], strides = [1, 1]} : vector<2x128xi32> to vector<1x128xi32>
    %46 = vector.broadcast %45 : vector<1x128xi32> to vector<16x128xi32>
    %47 = arith.cmpi eq, %44, %46 : vector<16x128xi32>
    %48 = arith.extui %47 : vector<16x128xi1> to vector<16x128xi32>
    %49 = arith.sitofp %48 : vector<16x128xi32> to vector<16x128xf32>
    %50 = tpu.iota {dimensions = array<i32: 0>} : vector<24x128xi32>
    %51 = vector.extract_strided_slice %43 {offsets = [1, 0], sizes = [1, 128], strides = [1, 1]} : vector<2x128xi32> to vector<1x128xi32>
    %52 = vector.broadcast %51 : vector<1x128xi32> to vector<24x128xi32>
    %53 = arith.cmpi eq, %50, %52 : vector<24x128xi32>
    %54 = arith.extui %53 : vector<24x128xi1> to vector<24x128xi32>
    %55 = arith.sitofp %54 : vector<24x128xi32> to vector<24x128xf32>
    %56 = tpu.transpose %42, [1, 0] : vector<24x32xf32> -> vector<32x24xf32>
    %cst_41 = arith.constant dense<0.000000e+00> : vector<16x24xf32>
    %57 = tpu.matmul %35, %56, %cst_41 {dimension_numbers = #tpu.dot_dimension_numbers<[1], [0], [0], [1], [0, 0, 1, 1], [], []>} : vector<16x32xf32>, vector<32x24xf32>, vector<16x24xf32> -> vector<16x24xf32>
    %cst_42 = arith.constant dense<0.000000e+00> : vector<16x128xf32>
    %58 = tpu.matmul %57, %55, %cst_42 {dimension_numbers = #tpu.dot_dimension_numbers<[1], [0], [0], [1], [0, 0, 1, 1], [], []>} : vector<16x24xf32>, vector<24x128xf32>, vector<16x128xf32> -> vector<16x128xf32>
    %59 = arith.mulf %49, %58 : vector<16x128xf32>
    %cst_43 = arith.constant dense<0.000000e+00> : vector<128xf32>
    %60 = vector.multi_reduction <add>, %59, %cst_43 [0] : vector<16x128xf32> to vector<128xf32>
    %61 = vector.shape_cast %60 : vector<128xf32> to vector<1x128xf32>
    %c0_44 = arith.constant 0 : index
    %c0_45 = arith.constant 0 : index
    %62 = vector.load %arg16[%c0_44, %c0_45] : memref<1x128xf32, #tpu.memory_space<vmem>>, vector<1x128xf32>
    tpu.vector_store %arg16[%c0_44, %c0_45], %61 {strides = array<i32>} : memref<1x128xf32, #tpu.memory_space<vmem>>, vector<1x128xf32>,
    return
  }
}

</mosaic_0001>

<llo_original>
// kernel: tpu_custom_call.1
$region0: #{tpu_custom_call.1}
  #allocation0 [shape = 'u32[]', space=smem, size = 0x4, offset = 0x4, fixed_abs, tag = 'smem constant byte address 0x4 - core index']
  #allocation1 [shape = 'u32[144,128]{1,0:T(1,128)}', space=vmem, size = 0x12000, scoped, tag = 'internal scratch']
  %s0 = inlined_call_operand.vmem [shape: s32[2,128], index: 0, kind: input, shape index: {}]
  %s1 = inlined_call_operand.vmem [shape: f32[16,32], index: 1, kind: input, shape index: {}]
  %s2 = inlined_call_operand.vmem [shape: f32[24,20], index: 2, kind: input, shape index: {}]
  %s3 = inlined_call_operand.vmem [shape: f32[20,32], index: 3, kind: input, shape index: {}]
  %s4 = inlined_call_operand.vmem [shape: f32[1,32], index: 4, kind: input, shape index: {}]
  %s5 = inlined_call_operand.vmem [shape: f32[24,32], index: 5, kind: input, shape index: {}]
  %s6 = inlined_call_operand.vmem [shape: f32[24,16], index: 6, kind: input, shape index: {}]
  %s7 = inlined_call_operand.vmem [shape: f32[16,24], index: 7, kind: input, shape index: {}]
  %s8 = inlined_call_operand.vmem [shape: f32[64,32], index: 8, kind: input, shape index: {}]
  %s9 = inlined_call_operand.vmem [shape: f32[1,32], index: 9, kind: input, shape index: {}]
  %s10 = inlined_call_operand.vmem [shape: f32[64,32], index: 10, kind: input, shape index: {}]
  %s11 = inlined_call_operand.vmem [shape: f32[1,32], index: 11, kind: input, shape index: {}]
  %s12 = inlined_call_operand.vmem [shape: f32[64,32], index: 12, kind: input, shape index: {}]
  %s13 = inlined_call_operand.vmem [shape: f32[1,32], index: 13, kind: input, shape index: {}]
  %s14 = inlined_call_operand.vmem [shape: f32[64,32], index: 14, kind: input, shape index: {}]
  %s15 = inlined_call_operand.vmem [shape: f32[1,32], index: 15, kind: input, shape index: {}]
  %s16 = inlined_call_operand.hbm [shape: f32[1,128], index: 16, kind: output, shape index: {}]
  %s17 = sld [smem:[#allocation0]]
  $region74: #{tpu_custom_call.1} parent=0
    _
  %s19 = ssub.s32 1, %s17
  %s20 = scalar_select 0, %s19, %s17
  $region1: #{tpu_custom_call.1} parent=0
    #allocation2 [shape = 'u8[512]{0}', space=vmem, size = 0x400, scoped, tag = 'output window, operand 0, single buffered']
    #allocation3 [shape = 's32[1]{0}', space=sflag, size = 0x4, scoped, tag = 'scoped memory for tpu_custom_call.1']
    %21 = vsyncpa [#allocation3], 0
    // Predicated region
    $region2: #{tpu_custom_call.1} parent=1 // pred_check
      _
    $region3: #{tpu_custom_call.1} parent=1 // pred_check_branch
      %23 = sbr.rel (0) target = $region5
    $region4: #{tpu_custom_call.1} parent=1 // pred_region
      _
    $region5: #{tpu_custom_call.1} parent=1 // pred_fallthru
      _
    // Predicated region
    $region6: #{tpu_custom_call.1} parent=1 // pred_check
      _
    $region7: #{tpu_custom_call.1} parent=1 // pred_check_branch
      %25 = sbr.rel (0) target = $region9
    $region8: #{tpu_custom_call.1} parent=1 // pred_region
      _
    $region9: #{tpu_custom_call.1} parent=1 // pred_fallthru
      _
    // Predicated region
    $region10: #{tpu_custom_call.1} parent=1 // pred_check
      _
    $region11: #{tpu_custom_call.1} parent=1 // pred_check_branch
      %27 = sbr.rel (0) target = $region13
    $region12: #{tpu_custom_call.1} parent=1 // pred_region
      _
    $region13: #{tpu_custom_call.1} parent=1 // pred_fallthru
      _
    // Predicated region
    $region14: #{tpu_custom_call.1} parent=1 // pred_check
      _
    $region15: #{tpu_custom_call.1} parent=1 // pred_check_branch
      %29 = sbr.rel (0) target = $region17
    $region16: #{tpu_custom_call.1} parent=1 // pred_region
      _
    $region17: #{tpu_custom_call.1} parent=1 // pred_fallthru
      _
    // Predicated region
    $region18: #{tpu_custom_call.1} parent=1 // pred_check
      _
    $region19: #{tpu_custom_call.1} parent=1 // pred_check_branch
      %31 = sbr.rel (0) target = $region21
    $region20: #{tpu_custom_call.1} parent=1 // pred_region
      _
    $region21: #{tpu_custom_call.1} parent=1 // pred_fallthru
      _
    // Predicated region
    $region22: #{tpu_custom_call.1} parent=1 // pred_check
      _
    $region23: #{tpu_custom_call.1} parent=1 // pred_check_branch
      %33 = sbr.rel (0) target = $region25
    $region24: #{tpu_custom_call.1} parent=1 // pred_region
      _
    $region25: #{tpu_custom_call.1} parent=1 // pred_fallthru
      _
    // Predicated region
    $region26: #{tpu_custom_call.1} parent=1 // pred_check
      _
    $region27: #{tpu_custom_call.1} parent=1 // pred_check_branch
      %35 = sbr.rel (0) target = $region29
    $region28: #{tpu_custom_call.1} parent=1 // pred_region
      _
    $region29: #{tpu_custom_call.1} parent=1 // pred_fallthru
      _
    // Predicated region
    $region30: #{tpu_custom_call.1} parent=1 // pred_check
      _
    $region31: #{tpu_custom_call.1} parent=1 // pred_check_branch
      %37 = sbr.rel (0) target = $region33
    $region32: #{tpu_custom_call.1} parent=1 // pred_region
      _
    $region33: #{tpu_custom_call.1} parent=1 // pred_fallthru
      _
    // Predicated region
    $region34: #{tpu_custom_call.1} parent=1 // pred_check
      _
    $region35: #{tpu_custom_call.1} parent=1 // pred_check_branch
      %39 = sbr.rel (0) target = $region37
    $region36: #{tpu_custom_call.1} parent=1 // pred_region
      _
    $region37: #{tpu_custom_call.1} parent=1 // pred_fallthru
      _
    // Predicated region
    $region38: #{tpu_custom_call.1} parent=1 // pred_check
      _
    $region39: #{tpu_custom_call.1} parent=1 // pred_check_branch
      %41 = sbr.rel (0) target = $region41
    $region40: #{tpu_custom_call.1} parent=1 // pred_region
      _
    $region41: #{tpu_custom_call.1} parent=1 // pred_fallthru
      _
    // Predicated region
    $region42: #{tpu_custom_call.1} parent=1 // pred_check
      _
    $region43: #{tpu_custom_call.1} parent=1 // pred_check_branch
      %43 = sbr.rel (0) target = $region45
    $region44: #{tpu_custom_call.1} parent=1 // pred_region
      _
    $region45: #{tpu_custom_call.1} parent=1 // pred_fallthru
      _
    // Predicated region
    $region46: #{tpu_custom_call.1} parent=1 // pred_check
      _
    $region47: #{tpu_custom_call.1} parent=1 // pred_check_branch
      %45 = sbr.rel (0) target = $region49
    $region48: #{tpu_custom_call.1} parent=1 // pred_region
      _
    $region49: #{tpu_custom_call.1} parent=1 // pred_fallthru
      _
    // Predicated region
    $region50: #{tpu_custom_call.1} parent=1 // pred_check
      _
    $region51: #{tpu_custom_call.1} parent=1 // pred_check_branch
      %47 = sbr.rel (0) target = $region53
    $region52: #{tpu_custom_call.1} parent=1 // pred_region
      _
    $region53: #{tpu_custom_call.1} parent=1 // pred_fallthru
      _
    // Predicated region
    $region54: #{tpu_custom_call.1} parent=1 // pred_check
      _
    $region55: #{tpu_custom_call.1} parent=1 // pred_check_branch
      %49 = sbr.rel (0) target = $region57
    $region56: #{tpu_custom_call.1} parent=1 // pred_region
      _
    $region57: #{tpu_custom_call.1} parent=1 // pred_fallthru
      _
    // Predicated region
    $region58: #{tpu_custom_call.1} parent=1 // pred_check
      _
    $region59: #{tpu_custom_call.1} parent=1 // pred_check_branch
      %51 = sbr.rel (0) target = $region61
    $region60: #{tpu_custom_call.1} parent=1 // pred_region
      _
    $region61: #{tpu_custom_call.1} parent=1 // pred_fallthru
      _
    // Predicated region
    $region62: #{tpu_custom_call.1} parent=1 // pred_check
      _
    $region63: #{tpu_custom_call.1} parent=1 // pred_check_branch
      %53 = sbr.rel (0) target = $region65
    $region64: #{tpu_custom_call.1} parent=1 // pred_region
      _
    $region65: #{tpu_custom_call.1} parent=1 // pred_fallthru
      _
    %v54 = vld [vmem:[%s1] sm:$0xff]
    %v55 = vld [vmem:[%s1 + $0x8] sm:$0xff]
    %v56 = vld [vmem:[%s2] sm:$0xff]
    %v57 = vld [vmem:[%s2 + $0x8] sm:$0xff]
    %v58 = vld [vmem:[%s2 + $0x10] sm:$0xff]
    %v59 = vld [vmem:[%s3] sm:$0xff]
    %v60 = vld [vmem:[%s3 + $0x8] sm:$0xff]
    %v61 = vld [vmem:[%s3 + $0x10] sm:$0xf]
    %v62 = vld [vmem:[%s4] sm:$0x1]
    %v64 = vlaneseq
    %v65 = vshrl.u32 %v64, 7
    %v66 = vsub.s32 0, %v65
    %v67 = vrot.slane %v62, %v66
    %vm69 = vcmask 162816
    %v71 = vsel %vm69, %v56, 0
    %v74 = vsel %vm69, %v57, 0
    %v77 = vsel %vm69, %v58, 0
    %vm79 = vcmask 1043456
    %v81 = vsel %vm79, %v61, 0
    %83 = vmatprep.subr.mxu0 0.0
    %84 = vmatpush1.msra.mxu0 %v59
    %85 = vmatprep.subr.mxu0 0.0
    %86 = vmatpush1.msra.mxu0 %v60
    %87 = vmatprep.subr.mxu0 0.0
    %88 = vmatpush1.msra.mxu0 %v81
    %89 = vmatprep.subr.mxu0 0.0
    %90 = vmatpush1.msra.mxu0 0.0
    %91 = vmatprep.subr.mxu0 0.0
    %92 = vmatpush1.msra.mxu0 0.0
    %93 = vmatprep.subr.mxu0 0.0
    %94 = vmatpush1.msra.mxu0 0.0
    %95 = vmatprep.subr.mxu0 0.0
    %96 = vmatpush1.msra.mxu0 0.0
    %97 = vmatprep.subr.mxu0 0.0
    %98 = vmatpush1.msra.mxu0 0.0
    %99 = vmatprep.subr.mxu0 0.0
    %100 = vmatpush1.msra.mxu0 0.0
    %101 = vmatprep.subr.mxu0 0.0
    %102 = vmatpush1.msra.mxu0 0.0
    %103 = vmatprep.subr.mxu0 0.0
    %104 = vmatpush1.msra.mxu0 0.0
    %105 = vmatprep.subr.mxu0 0.0
    %106 = vmatpush1.msra.mxu0 0.0
    %107 = vmatprep.subr.mxu0 0.0
    %108 = vmatpush1.msra.mxu0 0.0
    %109 = vmatprep.subr.mxu0 0.0
    %110 = vmatpush1.msra.mxu0 0.0
    %111 = vmatprep.subr.mxu0 0.0
    %112 = vmatpush1.msra.mxu0 0.0
    %113 = vmatprep.subr.mxu0 0.0
    %114 = vmatpush1.msra.mxu0 0.0
    %115 = vmatprep.subr.mxu0 0.0
    %116 = vmatpush1.msra.mxu0 0.0
    %117 = vmatprep.subr.mxu0 0.0
    %118 = vmatpush1.msra.mxu0 0.0
    %119 = vmatprep.subr.mxu0 0.0
    %120 = vmatpush1.msra.mxu0 0.0
    %121 = vmatprep.subr.mxu0 0.0
    %122 = vmatpush1.msra.mxu0 0.0
    %123 = vmatprep.subr.mxu0 0.0
    %124 = vmatpush1.msra.mxu0 0.0
    %125 = vmatprep.subr.mxu0 0.0
    %126 = vmatpush1.msra.mxu0 0.0
    %127 = vmatprep.subr.mxu0 0.0
    %128 = vmatpush1.msra.mxu0 0.0
    %129 = vmatprep.subr.mxu0 0.0
    %130 = vmatpush1.msra.mxu0 0.0
    %131 = vmatprep.subr.mxu0 0.0
    %132 = vmatpush1.msra.mxu0 0.0
    %133 = vmatprep.subr.mxu0 0.0
    %134 = vmatpush1.msra.mxu0 0.0
    %135 = vmatprep.subr.mxu0 0.0
    %136 = vmatpush1.msra.mxu0 0.0
    %137 = vmatprep.subr.mxu0 0.0
    %138 = vmatpush1.msra.mxu0 0.0
    %139 = vmatprep.subr.mxu0 0.0
    %140 = vmatpush1.msra.mxu0 0.0
    %141 = vmatprep.subr.mxu0 0.0
    %142 = vmatpush1.msra.mxu0 0.0
    %143 = vmatprep.subr.mxu0 0.0
    %144 = vmatpush1.msra.mxu0 0.0
    %145 = vmatprep.subr.mxu0 0.0
    %146 = vmatpush1.msra.mxu0 0.0
    %147 = vmatprep.mubr.f32.mxu0 0.0
    %148 = vmatmul.mubr.f32.gmra.mrb[0].mxu0 %v71
    %v149 = vpop.f32.mrb[0].mxu0
    %v150 = vadd.f32 %v67, %v149
    %v151 = vpop.f32.mrb[0].mxu0
    %152 = vmatprep.mubr.f32.mxu0 0.0
    %153 = vmatmul.mubr.f32.gmra.mrb[0].mxu0 %v74
    %v154 = vpop.f32.mrb[0].mxu0
    %v155 = vadd.f32 %v67, %v154
    %v156 = vpop.f32.mrb[0].mxu0
    %157 = vmatprep.mubr.f32.mxu0 0.0
    %158 = vmatmul.mubr.f32.gmra.mrb[0].mxu0 %v77
    %v159 = vpop.f32.mrb[0].mxu0
    %v160 = vadd.f32 %v67, %v159
    %v161 = vpop.f32.mrb[0].mxu0
    %162 = vdwg.mxu0
    %v163 = vld [vmem:[%s5] sm:$0xff]
    %v164 = vld [vmem:[%s5 + $0x8] sm:$0xff]
    %v165 = vld [vmem:[%s5 + $0x10] sm:$0xff]
    %v166 = vadd.f32 %v150, %v163
    %v167 = vadd.f32 %v155, %v164
    %v168 = vadd.f32 %v160, %v165
    %v169 = vld [vmem:[%s6] sm:$0xff]
    %v170 = vld [vmem:[%s6 + $0x8] sm:$0xff]
    %v171 = vld [vmem:[%s6 + $0x10] sm:$0xff]
    %v172 = vld [vmem:[%s7] sm:$0xff]
    %v173 = vld [vmem:[%s7 + $0x8] sm:$0xff]
    %v174 = vld [vmem:[%s10] sm:$0xff]
    %v175 = vld [vmem:[%s10 + $0x8] sm:$0xff]
    %v176 = vld [vmem:[%s10 + $0x10] sm:$0xff]
    %v177 = vld [vmem:[%s10 + $0x18] sm:$0xff]
    %v178 = vld [vmem:[%s10 + $0x20] sm:$0xff]
    %v179 = vld [vmem:[%s10 + $0x28] sm:$0xff]
    %v180 = vld [vmem:[%s10 + $0x30] sm:$0xff]
    %v181 = vld [vmem:[%s10 + $0x38] sm:$0xff]
    %v182 = vld [vmem:[%s11] sm:$0x1]
    %vm183 = vcmask 195584
    %v185 = vsel %vm183, %v172, 0
    %v188 = vsel %vm183, %v173, 0
    %190 = vmatprep.subr.mxu0 0.0
    %191 = vmatpush1.msra.mxu0 %v166
    %192 = vmatprep.subr.mxu0 0.0
    %193 = vmatpush1.msra.mxu0 %v167
    %194 = vmatprep.subr.mxu0 0.0
    %195 = vmatpush1.msra.mxu0 %v168
    %196 = vmatprep.subr.mxu0 0.0
    %197 = vmatpush1.msra.mxu0 0.0
    %198 = vmatprep.subr.mxu0 0.0
    %199 = vmatpush1.msra.mxu0 0.0
    %200 = vmatprep.subr.mxu0 0.0
    %201 = vmatpush1.msra.mxu0 0.0
    %202 = vmatprep.subr.mxu0 0.0
    %203 = vmatpush1.msra.mxu0 0.0
    %204 = vmatprep.subr.mxu0 0.0
    %205 = vmatpush1.msra.mxu0 0.0
    %206 = vmatprep.subr.mxu0 0.0
    %207 = vmatpush1.msra.mxu0 0.0
    %208 = vmatprep.subr.mxu0 0.0
    %209 = vmatpush1.msra.mxu0 0.0
    %210 = vmatprep.subr.mxu0 0.0
    %211 = vmatpush1.msra.mxu0 0.0
    %212 = vmatprep.subr.mxu0 0.0
    %213 = vmatpush1.msra.mxu0 0.0
    %214 = vmatprep.subr.mxu0 0.0
    %215 = vmatpush1.msra.mxu0 0.0
    %216 = vmatprep.subr.mxu0 0.0
    %217 = vmatpush1.msra.mxu0 0.0
    %218 = vmatprep.subr.mxu0 0.0
    %219 = vmatpush1.msra.mxu0 0.0
    %220 = vmatprep.subr.mxu0 0.0
    %221 = vmatpush1.msra.mxu0 0.0
    %222 = vmatprep.subr.mxu0 0.0
    %223 = vmatpush1.msra.mxu0 0.0
    %224 = vmatprep.subr.mxu0 0.0
    %225 = vmatpush1.msra.mxu0 0.0
    %226 = vmatprep.subr.mxu0 0.0
    %227 = vmatpush1.msra.mxu0 0.0
    %228 = vmatprep.subr.mxu0 0.0
    %229 = vmatpush1.msra.mxu0 0.0
    %230 = vmatprep.subr.mxu0 0.0
    %231 = vmatpush1.msra.mxu0 0.0
    %232 = vmatprep.subr.mxu0 0.0
    %233 = vmatpush1.msra.mxu0 0.0
    %234 = vmatprep.subr.mxu0 0.0
    %235 = vmatpush1.msra.mxu0 0.0
    %236 = vmatprep.subr.mxu0 0.0
    %237 = vmatpush1.msra.mxu0 0.0
    %238 = vmatprep.subr.mxu0 0.0
    %239 = vmatpush1.msra.mxu0 0.0
    %240 = vmatprep.subr.mxu0 0.0
    %241 = vmatpush1.msra.mxu0 0.0
    %242 = vmatprep.subr.mxu0 0.0
    %243 = vmatpush1.msra.mxu0 0.0
    %244 = vmatprep.subr.mxu0 0.0
    %245 = vmatpush1.msra.mxu0 0.0
    %246 = vmatprep.subr.mxu0 0.0
    %247 = vmatpush1.msra.mxu0 0.0
    %248 = vmatprep.subr.mxu0 0.0
    %249 = vmatpush1.msra.mxu0 0.0
    %250 = vmatprep.subr.mxu0 0.0
    %251 = vmatpush1.msra.mxu0 0.0
    %252 = vmatprep.subr.mxu0 0.0
    %253 = vmatpush1.msra.mxu0 0.0
    %254 = vmatprep.mubr.f32.mxu0 0.0
    %255 = vmatmul.mubr.f32.gmra.mrb[0].mxu0 %v185
    %v256 = vpop.f32.mrb[0].mxu0
    %v257 = vadd.f32 0.0, %v256
    %v258 = vpop.f32.mrb[0].mxu0
    %259 = vmatprep.mubr.f32.mxu0 0.0
    %260 = vmatmul.mubr.f32.gmra.mrb[0].mxu0 %v188
    %v261 = vpop.f32.mrb[0].mxu0
    %v262 = vadd.f32 0.0, %v261
    %v263 = vpop.f32.mrb[0].mxu0
    %264 = vdwg.mxu0
    %267 = vrot.lane.b32.xlu0 %v54, 32
    %v268 = vpop.permute.xlu0 %267
    %269 = vrot.lane.b32.xlu0 %v55, 32
    %v270 = vpop.permute.xlu0 %269
    %vm273 = vcmask 261120
    %v274 = vsel %vm273, %v257, %v268
    %v275 = vsel %vm273, %v262, %v270
    %v277 = vlaneseq
    %v278 = vshrl.u32 %v277, 7
    %v279 = vsub.s32 0, %v278
    %v280 = vrot.slane %v182, %v279
    %vm282 = vcmask 523264
    %v284 = vsel %vm282, %v274, 0
    %v287 = vsel %vm282, %v275, 0
    %289 = vmatprep.subr.mxu0 0.0
    %290 = vmatpush1.msra.mxu0 %v174
    %291 = vmatprep.subr.mxu0 0.0
    %292 = vmatpush1.msra.mxu0 %v175
    %293 = vmatprep.subr.mxu0 0.0
    %294 = vmatpush1.msra.mxu0 %v176
    %295 = vmatprep.subr.mxu0 0.0
    %296 = vmatpush1.msra.mxu0 %v177
    %297 = vmatprep.subr.mxu0 0.0
    %298 = vmatpush1.msra.mxu0 %v178
    %299 = vmatprep.subr.mxu0 0.0
    %300 = vmatpush1.msra.mxu0 %v179
    %301 = vmatprep.subr.mxu0 0.0
    %302 = vmatpush1.msra.mxu0 %v180
    %303 = vmatprep.subr.mxu0 0.0
    %304 = vmatpush1.msra.mxu0 %v181
    %305 = vmatprep.subr.mxu0 0.0
    %306 = vmatpush1.msra.mxu0 0.0
    %307 = vmatprep.subr.mxu0 0.0
    %308 = vmatpush1.msra.mxu0 0.0
    %309 = vmatprep.subr.mxu0 0.0
    %310 = vmatpush1.msra.mxu0 0.0
    %311 = vmatprep.subr.mxu0 0.0
    %312 = vmatpush1.msra.mxu0 0.0
    %313 = vmatprep.subr.mxu0 0.0
    %314 = vmatpush1.msra.mxu0 0.0
    %315 = vmatprep.subr.mxu0 0.0
    %316 = vmatpush1.msra.mxu0 0.0
    %317 = vmatprep.subr.mxu0 0.0
    %318 = vmatpush1.msra.mxu0 0.0
    %319 = vmatprep.subr.mxu0 0.0
    %320 = vmatpush1.msra.mxu0 0.0
    %321 = vmatprep.subr.mxu0 0.0
    %322 = vmatpush1.msra.mxu0 0.0
    %323 = vmatprep.subr.mxu0 0.0
    %324 = vmatpush1.msra.mxu0 0.0
    %325 = vmatprep.subr.mxu0 0.0
    %326 = vmatpush1.msra.mxu0 0.0
    %327 = vmatprep.subr.mxu0 0.0
    %328 = vmatpush1.msra.mxu0 0.0
    %329 = vmatprep.subr.mxu0 0.0
    %330 = vmatpush1.msra.mxu0 0.0
    %331 = vmatprep.subr.mxu0 0.0
    %332 = vmatpush1.msra.mxu0 0.0
    %333 = vmatprep.subr.mxu0 0.0
    %334 = vmatpush1.msra.mxu0 0.0
    %335 = vmatprep.subr.mxu0 0.0
    %336 = vmatpush1.msra.mxu0 0.0
    %337 = vmatprep.subr.mxu0 0.0
    %338 = vmatpush1.msra.mxu0 0.0
    %339 = vmatprep.subr.mxu0 0.0
    %340 = vmatpush1.msra.mxu0 0.0
    %341 = vmatprep.subr.mxu0 0.0
    %342 = vmatpush1.msra.mxu0 0.0
    %343 = vmatprep.subr.mxu0 0.0
    %344 = vmatpush1.msra.mxu0 0.0
    %345 = vmatprep.subr.mxu0 0.0
    %346 = vmatpush1.msra.mxu0 0.0
    %347 = vmatprep.subr.mxu0 0.0
    %348 = vmatpush1.msra.mxu0 0.0
    %349 = vmatprep.subr.mxu0 0.0
    %350 = vmatpush1.msra.mxu0 0.0
    %351 = vmatprep.subr.mxu0 0.0
    %352 = vmatpush1.msra.mxu0 0.0
    %353 = vmatprep.mubr.f32.mxu0 0.0
    %354 = vmatmul.mubr.f32.gmra.mrb[0].mxu0 %v284
    %v355 = vpop.f32.mrb[0].mxu0
    %v356 = vadd.f32 %v280, %v355
    %v357 = vpop.f32.mrb[0].mxu0
    %358 = vmatprep.mubr.f32.mxu0 0.0
    %359 = vmatmul.mubr.f32.gmra.mrb[0].mxu0 %v287
    %v360 = vpop.f32.mrb[0].mxu0
    %v361 = vadd.f32 %v280, %v360
    %v362 = vpop.f32.mrb[0].mxu0
    %363 = vdwg.mxu0
    %v364 = vmax.f32 %v356, 0.0
    %v365 = vmax.f32 %v361, 0.0
    %v366 = vld [vmem:[%s8] sm:$0xff]
    %v367 = vld [vmem:[%s8 + $0x8] sm:$0xff]
    %v368 = vld [vmem:[%s8 + $0x10] sm:$0xff]
    %v369 = vld [vmem:[%s8 + $0x18] sm:$0xff]
    %v370 = vld [vmem:[%s8 + $0x20] sm:$0xff]
    %v371 = vld [vmem:[%s8 + $0x28] sm:$0xff]
    %v372 = vld [vmem:[%s8 + $0x30] sm:$0xff]
    %v373 = vld [vmem:[%s8 + $0x38] sm:$0xff]
    %v374 = vld [vmem:[%s9] sm:$0x1]
    %vm375 = vcmask 130048
    %v377 = vsel %vm375, %v169, 0
    %v380 = vsel %vm375, %v170, 0
    %v383 = vsel %vm375, %v171, 0
    %385 = vmatprep.subr.mxu0 0.0
    %386 = vmatpush1.msra.mxu0 %v54
    %387 = vmatprep.subr.mxu0 0.0
    %388 = vmatpush1.msra.mxu0 %v55
    %389 = vmatprep.subr.mxu0 0.0
    %390 = vmatpush1.msra.mxu0 0.0
    %391 = vmatprep.subr.mxu0 0.0
    %392 = vmatpush1.msra.mxu0 0.0
    %393 = vmatprep.subr.mxu0 0.0
    %394 = vmatpush1.msra.mxu0 0.0
    %395 = vmatprep.subr.mxu0 0.0
    %396 = vmatpush1.msra.mxu0 0.0
    %397 = vmatprep.subr.mxu0 0.0
    %398 = vmatpush1.msra.mxu0 0.0
    %399 = vmatprep.subr.mxu0 0.0
    %400 = vmatpush1.msra.mxu0 0.0
    %401 = vmatprep.subr.mxu0 0.0
    %402 = vmatpush1.msra.mxu0 0.0
    %403 = vmatprep.subr.mxu0 0.0
    %404 = vmatpush1.msra.mxu0 0.0
    %405 = vmatprep.subr.mxu0 0.0
    %406 = vmatpush1.msra.mxu0 0.0
    %407 = vmatprep.subr.mxu0 0.0
    %408 = vmatpush1.msra.mxu0 0.0
    %409 = vmatprep.subr.mxu0 0.0
    %410 = vmatpush1.msra.mxu0 0.0
    %411 = vmatprep.subr.mxu0 0.0
    %412 = vmatpush1.msra.mxu0 0.0
    %413 = vmatprep.subr.mxu0 0.0
    %414 = vmatpush1.msra.mxu0 0.0
    %415 = vmatprep.subr.mxu0 0.0
    %416 = vmatpush1.msra.mxu0 0.0
    %417 = vmatprep.subr.mxu0 0.0
    %418 = vmatpush1.msra.mxu0 0.0
    %419 = vmatprep.subr.mxu0 0.0
    %420 = vmatpush1.msra.mxu0 0.0
    %421 = vmatprep.subr.mxu0 0.0
    %422 = vmatpush1.msra.mxu0 0.0
    %423 = vmatprep.subr.mxu0 0.0
    %424 = vmatpush1.msra.mxu0 0.0
    %425 = vmatprep.subr.mxu0 0.0
    %426 = vmatpush1.msra.mxu0 0.0
    %427 = vmatprep.subr.mxu0 0.0
    %428 = vmatpush1.msra.mxu0 0.0
    %429 = vmatprep.subr.mxu0 0.0
    %430 = vmatpush1.msra.mxu0 0.0
    %431 = vmatprep.subr.mxu0 0.0
    %432 = vmatpush1.msra.mxu0 0.0
    %433 = vmatprep.subr.mxu0 0.0
    %434 = vmatpush1.msra.mxu0 0.0
    %435 = vmatprep.subr.mxu0 0.0
    %436 = vmatpush1.msra.mxu0 0.0
    %437 = vmatprep.subr.mxu0 0.0
    %438 = vmatpush1.msra.mxu0 0.0
    %439 = vmatprep.subr.mxu0 0.0
    %440 = vmatpush1.msra.mxu0 0.0
    %441 = vmatprep.subr.mxu0 0.0
    %442 = vmatpush1.msra.mxu0 0.0
    %443 = vmatprep.subr.mxu0 0.0
    %444 = vmatpush1.msra.mxu0 0.0
    %445 = vmatprep.subr.mxu0 0.0
    %446 = vmatpush1.msra.mxu0 0.0
    %447 = vmatprep.subr.mxu0 0.0
    %448 = vmatpush1.msra.mxu0 0.0
    %449 = vmatprep.mubr.f32.mxu0 0.0
    %450 = vmatmul.mubr.f32.gmra.mrb[0].mxu0 %v377
    %v451 = vpop.f32.mrb[0].mxu0
    %v452 = vadd.f32 0.0, %v451
    %v453 = vpop.f32.mrb[0].mxu0
    %454 = vmatprep.mubr.f32.mxu0 0.0
    %455 = vmatmul.mubr.f32.gmra.mrb[0].mxu0 %v380
    %v456 = vpop.f32.mrb[0].mxu0
    %v457 = vadd.f32 0.0, %v456
    %v458 = vpop.f32.mrb[0].mxu0
    %459 = vmatprep.mubr.f32.mxu0 0.0
    %460 = vmatmul.mubr.f32.gmra.mrb[0].mxu0 %v383
    %v461 = vpop.f32.mrb[0].mxu0
    %v462 = vadd.f32 0.0, %v461
    %v463 = vpop.f32.mrb[0].mxu0
    %464 = vdwg.mxu0
    %468 = vrot.lane.b32.xlu0 %v166, 32
    %v469 = vpop.permute.xlu0 %468
    %470 = vrot.lane.b32.xlu0 %v167, 32
    %v471 = vpop.permute.xlu0 %470
    %472 = vrot.lane.b32.xlu0 %v168, 32
    %v473 = vpop.permute.xlu0 %472
    %v477 = vsel %vm273, %v452, %v469
    %v478 = vsel %vm273, %v457, %v471
    %v479 = vsel %vm273, %v462, %v473
    %v481 = vlaneseq
    %v482 = vshrl.u32 %v481, 7
    %v483 = vsub.s32 0, %v482
    %v484 = vrot.slane %v374, %v483
    %v487 = vsel %vm282, %v477, 0
    %v490 = vsel %vm282, %v478, 0
    %v493 = vsel %vm282, %v479, 0
    %495 = vmatprep.subr.mxu0 0.0
    %496 = vmatpush1.msra.mxu0 %v366
    %497 = vmatprep.subr.mxu0 0.0
    %498 = vmatpush1.msra.mxu0 %v367
    %499 = vmatprep.subr.mxu0 0.0
    %500 = vmatpush1.msra.mxu0 %v368
    %501 = vmatprep.subr.mxu0 0.0
    %502 = vmatpush1.msra.mxu0 %v369
    %503 = vmatprep.subr.mxu0 0.0
    %504 = vmatpush1.msra.mxu0 %v370
    %505 = vmatprep.subr.mxu0 0.0
    %506 = vmatpush1.msra.mxu0 %v371
    %507 = vmatprep.subr.mxu0 0.0
    %508 = vmatpush1.msra.mxu0 %v372
    %509 = vmatprep.subr.mxu0 0.0
    %510 = vmatpush1.msra.mxu0 %v373
    %511 = vmatprep.subr.mxu0 0.0
    %512 = vmatpush1.msra.mxu0 0.0
    %513 = vmatprep.subr.mxu0 0.0
    %514 = vmatpush1.msra.mxu0 0.0
    %515 = vmatprep.subr.mxu0 0.0
    %516 = vmatpush1.msra.mxu0 0.0
    %517 = vmatprep.subr.mxu0 0.0
    %518 = vmatpush1.msra.mxu0 0.0
    %519 = vmatprep.subr.mxu0 0.0
    %520 = vmatpush1.msra.mxu0 0.0
    %521 = vmatprep.subr.mxu0 0.0
    %522 = vmatpush1.msra.mxu0 0.0
    %523 = vmatprep.subr.mxu0 0.0
    %524 = vmatpush1.msra.mxu0 0.0
    %525 = vmatprep.subr.mxu0 0.0
    %526 = vmatpush1.msra.mxu0 0.0
    %527 = vmatprep.subr.mxu0 0.0
    %528 = vmatpush1.msra.mxu0 0.0
    %529 = vmatprep.subr.mxu0 0.0
    %530 = vmatpush1.msra.mxu0 0.0
    %531 = vmatprep.subr.mxu0 0.0
    %532 = vmatpush1.msra.mxu0 0.0
    %533 = vmatprep.subr.mxu0 0.0
    %534 = vmatpush1.msra.mxu0 0.0
    %535 = vmatprep.subr.mxu0 0.0
    %536 = vmatpush1.msra.mxu0 0.0
    %537 = vmatprep.subr.mxu0 0.0
    %538 = vmatpush1.msra.mxu0 0.0
    %539 = vmatprep.subr.mxu0 0.0
    %540 = vmatpush1.msra.mxu0 0.0
    %541 = vmatprep.subr.mxu0 0.0
    %542 = vmatpush1.msra.mxu0 0.0
    %543 = vmatprep.subr.mxu0 0.0
    %544 = vmatpush1.msra.mxu0 0.0
    %545 = vmatprep.subr.mxu0 0.0
    %546 = vmatpush1.msra.mxu0 0.0
    %547 = vmatprep.subr.mxu0 0.0
    %548 = vmatpush1.msra.mxu0 0.0
    %549 = vmatprep.subr.mxu0 0.0
    %550 = vmatpush1.msra.mxu0 0.0
    %551 = vmatprep.subr.mxu0 0.0
    %552 = vmatpush1.msra.mxu0 0.0
    %553 = vmatprep.subr.mxu0 0.0
    %554 = vmatpush1.msra.mxu0 0.0
    %555 = vmatprep.subr.mxu0 0.0
    %556 = vmatpush1.msra.mxu0 0.0
    %557 = vmatprep.subr.mxu0 0.0
    %558 = vmatpush1.msra.mxu0 0.0
    %559 = vmatprep.mubr.f32.mxu0 0.0
    %560 = vmatmul.mubr.f32.gmra.mrb[0].mxu0 %v487
    %v561 = vpop.f32.mrb[0].mxu0
    %v562 = vadd.f32 %v484, %v561
    %v563 = vpop.f32.mrb[0].mxu0
    %564 = vmatprep.mubr.f32.mxu0 0.0
    %565 = vmatmul.mubr.f32.gmra.mrb[0].mxu0 %v490
    %v566 = vpop.f32.mrb[0].mxu0
    %v567 = vadd.f32 %v484, %v566
    %v568 = vpop.f32.mrb[0].mxu0
    %569 = vmatprep.mubr.f32.mxu0 0.0
    %570 = vmatmul.mubr.f32.gmra.mrb[0].mxu0 %v493
    %v571 = vpop.f32.mrb[0].mxu0
    %v572 = vadd.f32 %v484, %v571
    %v573 = vpop.f32.mrb[0].mxu0
    %574 = vdwg.mxu0
    %v575 = vmax.f32 %v562, 0.0
    %v576 = vmax.f32 %v567, 0.0
    %v577 = vmax.f32 %v572, 0.0
    %v578 = vld [vmem:[%s14] sm:$0xff]
    %v579 = vld [vmem:[%s14 + $0x8] sm:$0xff]
    %v580 = vld [vmem:[%s14 + $0x10] sm:$0xff]
    %v581 = vld [vmem:[%s14 + $0x18] sm:$0xff]
    %v582 = vld [vmem:[%s14 + $0x20] sm:$0xff]
    %v583 = vld [vmem:[%s14 + $0x28] sm:$0xff]
    %v584 = vld [vmem:[%s14 + $0x30] sm:$0xff]
    %v585 = vld [vmem:[%s14 + $0x38] sm:$0xff]
    %v586 = vld [vmem:[%s15] sm:$0x1]
    %587 = vmatprep.subr.mxu0 0.0
    %588 = vmatpush1.msra.mxu0 %v575
    %589 = vmatprep.subr.mxu0 0.0
    %590 = vmatpush1.msra.mxu0 %v576
    %591 = vmatprep.subr.mxu0 0.0
    %592 = vmatpush1.msra.mxu0 %v577
    %593 = vmatprep.subr.mxu0 0.0
    %594 = vmatpush1.msra.mxu0 0.0
    %595 = vmatprep.subr.mxu0 0.0
    %596 = vmatpush1.msra.mxu0 0.0
    %597 = vmatprep.subr.mxu0 0.0
    %598 = vmatpush1.msra.mxu0 0.0
    %599 = vmatprep.subr.mxu0 0.0
    %600 = vmatpush1.msra.mxu0 0.0
    %601 = vmatprep.subr.mxu0 0.0
    %602 = vmatpush1.msra.mxu0 0.0
    %603 = vmatprep.subr.mxu0 0.0
    %604 = vmatpush1.msra.mxu0 0.0
    %605 = vmatprep.subr.mxu0 0.0
    %606 = vmatpush1.msra.mxu0 0.0
    %607 = vmatprep.subr.mxu0 0.0
    %608 = vmatpush1.msra.mxu0 0.0
    %609 = vmatprep.subr.mxu0 0.0
    %610 = vmatpush1.msra.mxu0 0.0
    %611 = vmatprep.subr.mxu0 0.0
    %612 = vmatpush1.msra.mxu0 0.0
    %613 = vmatprep.subr.mxu0 0.0
    %614 = vmatpush1.msra.mxu0 0.0
    %615 = vmatprep.subr.mxu0 0.0
    %616 = vmatpush1.msra.mxu0 0.0
    %617 = vmatprep.subr.mxu0 0.0
    %618 = vmatpush1.msra.mxu0 0.0
    %619 = vmatprep.subr.mxu0 0.0
    %620 = vmatpush1.msra.mxu0 0.0
    %621 = vmatprep.subr.mxu0 0.0
    %622 = vmatpush1.msra.mxu0 0.0
    %623 = vmatprep.subr.mxu0 0.0
    %624 = vmatpush1.msra.mxu0 0.0
    %625 = vmatprep.subr.mxu0 0.0
    %626 = vmatpush1.msra.mxu0 0.0
    %627 = vmatprep.subr.mxu0 0.0
    %628 = vmatpush1.msra.mxu0 0.0
    %629 = vmatprep.subr.mxu0 0.0
    %630 = vmatpush1.msra.mxu0 0.0
    %631 = vmatprep.subr.mxu0 0.0
    %632 = vmatpush1.msra.mxu0 0.0
    %633 = vmatprep.subr.mxu0 0.0
    %634 = vmatpush1.msra.mxu0 0.0
    %635 = vmatprep.subr.mxu0 0.0
    %636 = vmatpush1.msra.mxu0 0.0
    %637 = vmatprep.subr.mxu0 0.0
    %638 = vmatpush1.msra.mxu0 0.0
    %639 = vmatprep.subr.mxu0 0.0
    %640 = vmatpush1.msra.mxu0 0.0
    %641 = vmatprep.subr.mxu0 0.0
    %642 = vmatpush1.msra.mxu0 0.0
    %643 = vmatprep.subr.mxu0 0.0
    %644 = vmatpush1.msra.mxu0 0.0
    %645 = vmatprep.subr.mxu0 0.0
    %646 = vmatpush1.msra.mxu0 0.0
    %647 = vmatprep.subr.mxu0 0.0
    %648 = vmatpush1.msra.mxu0 0.0
    %649 = vmatprep.subr.mxu0 0.0
    %650 = vmatpush1.msra.mxu0 0.0
    %651 = vmatprep.mubr.f32.mxu0 0.0
    %652 = vmatmul.mubr.f32.gmra.mrb[0].mxu0 %v185
    %v653 = vpop.f32.mrb[0].mxu0
    %v654 = vadd.f32 0.0, %v653
    %v655 = vpop.f32.mrb[0].mxu0
    %656 = vmatprep.mubr.f32.mxu0 0.0
    %657 = vmatmul.mubr.f32.gmra.mrb[0].mxu0 %v188
    %v658 = vpop.f32.mrb[0].mxu0
    %v659 = vadd.f32 0.0, %v658
    %v660 = vpop.f32.mrb[0].mxu0
    %661 = vdwg.mxu0
    %664 = vrot.lane.b32.xlu0 %v364, 32
    %v665 = vpop.permute.xlu0 %664
    %666 = vrot.lane.b32.xlu0 %v365, 32
    %v667 = vpop.permute.xlu0 %666
    %v670 = vsel %vm273, %v654, %v665
    %v671 = vsel %vm273, %v659, %v667
    %v673 = vlaneseq
    %v674 = vshrl.u32 %v673, 7
    %v675 = vsub.s32 0, %v674
    %v676 = vrot.slane %v586, %v675
    %v679 = vsel %vm282, %v670, 0
    %v682 = vsel %vm282, %v671, 0
    %684 = vmatprep.subr.mxu0 0.0
    %685 = vmatpush1.msra.mxu0 %v578
    %686 = vmatprep.subr.mxu0 0.0
    %687 = vmatpush1.msra.mxu0 %v579
    %688 = vmatprep.subr.mxu0 0.0
    %689 = vmatpush1.msra.mxu0 %v580
    %690 = vmatprep.subr.mxu0 0.0
    %691 = vmatpush1.msra.mxu0 %v581
    %692 = vmatprep.subr.mxu0 0.0
    %693 = vmatpush1.msra.mxu0 %v582
    %694 = vmatprep.subr.mxu0 0.0
    %695 = vmatpush1.msra.mxu0 %v583
    %696 = vmatprep.subr.mxu0 0.0
    %697 = vmatpush1.msra.mxu0 %v584
    %698 = vmatprep.subr.mxu0 0.0
    %699 = vmatpush1.msra.mxu0 %v585
    %700 = vmatprep.subr.mxu0 0.0
    %701 = vmatpush1.msra.mxu0 0.0
    %702 = vmatprep.subr.mxu0 0.0
    %703 = vmatpush1.msra.mxu0 0.0
    %704 = vmatprep.subr.mxu0 0.0
    %705 = vmatpush1.msra.mxu0 0.0
    %706 = vmatprep.subr.mxu0 0.0
    %707 = vmatpush1.msra.mxu0 0.0
    %708 = vmatprep.subr.mxu0 0.0
    %709 = vmatpush1.msra.mxu0 0.0
    %710 = vmatprep.subr.mxu0 0.0
    %711 = vmatpush1.msra.mxu0 0.0
    %712 = vmatprep.subr.mxu0 0.0
    %713 = vmatpush1.msra.mxu0 0.0
    %714 = vmatprep.subr.mxu0 0.0
    %715 = vmatpush1.msra.mxu0 0.0
    %716 = vmatprep.subr.mxu0 0.0
    %717 = vmatpush1.msra.mxu0 0.0
    %718 = vmatprep.subr.mxu0 0.0
    %719 = vmatpush1.msra.mxu0 0.0
    %720 = vmatprep.subr.mxu0 0.0
    %721 = vmatpush1.msra.mxu0 0.0
    %722 = vmatprep.subr.mxu0 0.0
    %723 = vmatpush1.msra.mxu0 0.0
    %724 = vmatprep.subr.mxu0 0.0
    %725 = vmatpush1.msra.mxu0 0.0
    %726 = vmatprep.subr.mxu0 0.0
    %727 = vmatpush1.msra.mxu0 0.0
    %728 = vmatprep.subr.mxu0 0.0
    %729 = vmatpush1.msra.mxu0 0.0
    %730 = vmatprep.subr.mxu0 0.0
    %731 = vmatpush1.msra.mxu0 0.0
    %732 = vmatprep.subr.mxu0 0.0
    %733 = vmatpush1.msra.mxu0 0.0
    %734 = vmatprep.subr.mxu0 0.0
    %735 = vmatpush1.msra.mxu0 0.0
    %736 = vmatprep.subr.mxu0 0.0
    %737 = vmatpush1.msra.mxu0 0.0
    %738 = vmatprep.subr.mxu0 0.0
    %739 = vmatpush1.msra.mxu0 0.0
    %740 = vmatprep.subr.mxu0 0.0
    %741 = vmatpush1.msra.mxu0 0.0
    %742 = vmatprep.subr.mxu0 0.0
    %743 = vmatpush1.msra.mxu0 0.0
    %744 = vmatprep.subr.mxu0 0.0
    %745 = vmatpush1.msra.mxu0 0.0
    %746 = vmatprep.subr.mxu0 0.0
    %747 = vmatpush1.msra.mxu0 0.0
    %748 = vmatprep.mubr.f32.mxu0 0.0
    %749 = vmatmul.mubr.f32.gmra.mrb[0].mxu0 %v679
    %v750 = vpop.f32.mrb[0].mxu0
    %v751 = vadd.f32 %v676, %v750
    %v752 = vpop.f32.mrb[0].mxu0
    %753 = vmatprep.mubr.f32.mxu0 0.0
    %754 = vmatmul.mubr.f32.gmra.mrb[0].mxu0 %v682
    %v755 = vpop.f32.mrb[0].mxu0
    %v756 = vadd.f32 %v676, %v755
    %v757 = vpop.f32.mrb[0].mxu0
    %758 = vdwg.mxu0
    %v759 = vld [vmem:[%s12] sm:$0xff]
    %v760 = vld [vmem:[%s12 + $0x8] sm:$0xff]
    %v761 = vld [vmem:[%s12 + $0x10] sm:$0xff]
    %v762 = vld [vmem:[%s12 + $0x18] sm:$0xff]
    %v763 = vld [vmem:[%s12 + $0x20] sm:$0xff]
    %v764 = vld [vmem:[%s12 + $0x28] sm:$0xff]
    %v765 = vld [vmem:[%s12 + $0x30] sm:$0xff]
    %v766 = vld [vmem:[%s12 + $0x38] sm:$0xff]
    %v767 = vld [vmem:[%s13] sm:$0x1]
    %768 = vmatprep.subr.mxu0 0.0
    %769 = vmatpush1.msra.mxu0 %v364
    %770 = vmatprep.subr.mxu0 0.0
    %771 = vmatpush1.msra.mxu0 %v365
    %772 = vmatprep.subr.mxu0 0.0
    %773 = vmatpush1.msra.mxu0 0.0
    %774 = vmatprep.subr.mxu0 0.0
    %775 = vmatpush1.msra.mxu0 0.0
    %776 = vmatprep.subr.mxu0 0.0
    %777 = vmatpush1.msra.mxu0 0.0
    %778 = vmatprep.subr.mxu0 0.0
    %779 = vmatpush1.msra.mxu0 0.0
    %780 = vmatprep.subr.mxu0 0.0
    %781 = vmatpush1.msra.mxu0 0.0
    %782 = vmatprep.subr.mxu0 0.0
    %783 = vmatpush1.msra.mxu0 0.0
    %784 = vmatprep.subr.mxu0 0.0
    %785 = vmatpush1.msra.mxu0 0.0
    %786 = vmatprep.subr.mxu0 0.0
    %787 = vmatpush1.msra.mxu0 0.0
    %788 = vmatprep.subr.mxu0 0.0
    %789 = vmatpush1.msra.mxu0 0.0
    %790 = vmatprep.subr.mxu0 0.0
    %791 = vmatpush1.msra.mxu0 0.0
    %792 = vmatprep.subr.mxu0 0.0
    %793 = vmatpush1.msra.mxu0 0.0
    %794 = vmatprep.subr.mxu0 0.0
    %795 = vmatpush1.msra.mxu0 0.0
    %796 = vmatprep.subr.mxu0 0.0
    %797 = vmatpush1.msra.mxu0 0.0
    %798 = vmatprep.subr.mxu0 0.0
    %799 = vmatpush1.msra.mxu0 0.0
    %800 = vmatprep.subr.mxu0 0.0
    %801 = vmatpush1.msra.mxu0 0.0
    %802 = vmatprep.subr.mxu0 0.0
    %803 = vmatpush1.msra.mxu0 0.0
    %804 = vmatprep.subr.mxu0 0.0
    %805 = vmatpush1.msra.mxu0 0.0
    %806 = vmatprep.subr.mxu0 0.0
    %807 = vmatpush1.msra.mxu0 0.0
    %808 = vmatprep.subr.mxu0 0.0
    %809 = vmatpush1.msra.mxu0 0.0
    %810 = vmatprep.subr.mxu0 0.0
    %811 = vmatpush1.msra.mxu0 0.0
    %812 = vmatprep.subr.mxu0 0.0
    %813 = vmatpush1.msra.mxu0 0.0
    %814 = vmatprep.subr.mxu0 0.0
    %815 = vmatpush1.msra.mxu0 0.0
    %816 = vmatprep.subr.mxu0 0.0
    %817 = vmatpush1.msra.mxu0 0.0
    %818 = vmatprep.subr.mxu0 0.0
    %819 = vmatpush1.msra.mxu0 0.0
    %820 = vmatprep.subr.mxu0 0.0
    %821 = vmatpush1.msra.mxu0 0.0
    %822 = vmatprep.subr.mxu0 0.0
    %823 = vmatpush1.msra.mxu0 0.0
    %824 = vmatprep.subr.mxu0 0.0
    %825 = vmatpush1.msra.mxu0 0.0
    %826 = vmatprep.subr.mxu0 0.0
    %827 = vmatpush1.msra.mxu0 0.0
    %828 = vmatprep.subr.mxu0 0.0
    %829 = vmatpush1.msra.mxu0 0.0
    %830 = vmatprep.subr.mxu0 0.0
    %831 = vmatpush1.msra.mxu0 0.0
    %832 = vmatprep.mubr.f32.mxu0 0.0
    %833 = vmatmul.mubr.f32.gmra.mrb[0].mxu0 %v377
    %v834 = vpop.f32.mrb[0].mxu0
    %v835 = vadd.f32 0.0, %v834
    %v836 = vpop.f32.mrb[0].mxu0
    %837 = vmatprep.mubr.f32.mxu0 0.0
    %838 = vmatmul.mubr.f32.gmra.mrb[0].mxu0 %v380
    %v839 = vpop.f32.mrb[0].mxu0
    %v840 = vadd.f32 0.0, %v839
    %v841 = vpop.f32.mrb[0].mxu0
    %842 = vmatprep.mubr.f32.mxu0 0.0
    %843 = vmatmul.mubr.f32.gmra.mrb[0].mxu0 %v383
    %v844 = vpop.f32.mrb[0].mxu0
    %v845 = vadd.f32 0.0, %v844
    %v846 = vpop.f32.mrb[0].mxu0
    %847 = vdwg.mxu0
    %851 = vrot.lane.b32.xlu0 %v575, 32
    %v852 = vpop.permute.xlu0 %851
    %853 = vrot.lane.b32.xlu0 %v576, 32
    %v854 = vpop.permute.xlu0 %853
    %855 = vrot.lane.b32.xlu0 %v577, 32
    %v856 = vpop.permute.xlu0 %855
    %v860 = vsel %vm273, %v835, %v852
    %v861 = vsel %vm273, %v840, %v854
    %v862 = vsel %vm273, %v845, %v856
    %v864 = vlaneseq
    %v865 = vshrl.u32 %v864, 7
    %v866 = vsub.s32 0, %v865
    %v867 = vrot.slane %v767, %v866
    %v870 = vsel %vm282, %v860, 0
    %v873 = vsel %vm282, %v861, 0
    %v876 = vsel %vm282, %v862, 0
    %878 = vmatprep.subr.mxu0 0.0
    %879 = vmatpush1.msra.mxu0 %v759
    %880 = vmatprep.subr.mxu0 0.0
    %881 = vmatpush1.msra.mxu0 %v760
    %882 = vmatprep.subr.mxu0 0.0
    %883 = vmatpush1.msra.mxu0 %v761
    %884 = vmatprep.subr.mxu0 0.0
    %885 = vmatpush1.msra.mxu0 %v762
    %886 = vmatprep.subr.mxu0 0.0
    %887 = vmatpush1.msra.mxu0 %v763
    %888 = vmatprep.subr.mxu0 0.0
    %889 = vmatpush1.msra.mxu0 %v764
    %890 = vmatprep.subr.mxu0 0.0
    %891 = vmatpush1.msra.mxu0 %v765
    %892 = vmatprep.subr.mxu0 0.0
    %893 = vmatpush1.msra.mxu0 %v766
    %894 = vmatprep.subr.mxu0 0.0
    %895 = vmatpush1.msra.mxu0 0.0
    %896 = vmatprep.subr.mxu0 0.0
    %897 = vmatpush1.msra.mxu0 0.0
    %898 = vmatprep.subr.mxu0 0.0
    %899 = vmatpush1.msra.mxu0 0.0
    %900 = vmatprep.subr.mxu0 0.0
    %901 = vmatpush1.msra.mxu0 0.0
    %902 = vmatprep.subr.mxu0 0.0
    %903 = vmatpush1.msra.mxu0 0.0
    %904 = vmatprep.subr.mxu0 0.0
    %905 = vmatpush1.msra.mxu0 0.0
    %906 = vmatprep.subr.mxu0 0.0
    %907 = vmatpush1.msra.mxu0 0.0
    %908 = vmatprep.subr.mxu0 0.0
    %909 = vmatpush1.msra.mxu0 0.0
    %910 = vmatprep.subr.mxu0 0.0
    %911 = vmatpush1.msra.mxu0 0.0
    %912 = vmatprep.subr.mxu0 0.0
    %913 = vmatpush1.msra.mxu0 0.0
    %914 = vmatprep.subr.mxu0 0.0
    %915 = vmatpush1.msra.mxu0 0.0
    %916 = vmatprep.subr.mxu0 0.0
    %917 = vmatpush1.msra.mxu0 0.0
    %918 = vmatprep.subr.mxu0 0.0
    %919 = vmatpush1.msra.mxu0 0.0
    %920 = vmatprep.subr.mxu0 0.0
    %921 = vmatpush1.msra.mxu0 0.0
    %922 = vmatprep.subr.mxu0 0.0
    %923 = vmatpush1.msra.mxu0 0.0
    %924 = vmatprep.subr.mxu0 0.0
    %925 = vmatpush1.msra.mxu0 0.0
    %926 = vmatprep.subr.mxu0 0.0
    %927 = vmatpush1.msra.mxu0 0.0
    %928 = vmatprep.subr.mxu0 0.0
    %929 = vmatpush1.msra.mxu0 0.0
    %930 = vmatprep.subr.mxu0 0.0
    %931 = vmatpush1.msra.mxu0 0.0
    %932 = vmatprep.subr.mxu0 0.0
    %933 = vmatpush1.msra.mxu0 0.0
    %934 = vmatprep.subr.mxu0 0.0
    %935 = vmatpush1.msra.mxu0 0.0
    %936 = vmatprep.subr.mxu0 0.0
    %937 = vmatpush1.msra.mxu0 0.0
    %938 = vmatprep.subr.mxu0 0.0
    %939 = vmatpush1.msra.mxu0 0.0
    %940 = vmatprep.subr.mxu0 0.0
    %941 = vmatpush1.msra.mxu0 0.0
    %942 = vmatprep.mubr.f32.mxu0 0.0
    %943 = vmatmul.mubr.f32.gmra.mrb[0].mxu0 %v870
    %v944 = vpop.f32.mrb[0].mxu0
    %v945 = vadd.f32 %v867, %v944
    %v946 = vpop.f32.mrb[0].mxu0
    %947 = vmatprep.mubr.f32.mxu0 0.0
    %948 = vmatmul.mubr.f32.gmra.mrb[0].mxu0 %v873
    %v949 = vpop.f32.mrb[0].mxu0
    %v950 = vadd.f32 %v867, %v949
    %v951 = vpop.f32.mrb[0].mxu0
    %952 = vmatprep.mubr.f32.mxu0 0.0
    %953 = vmatmul.mubr.f32.gmra.mrb[0].mxu0 %v876
    %v954 = vpop.f32.mrb[0].mxu0
    %v955 = vadd.f32 %v867, %v954
    %v956 = vpop.f32.mrb[0].mxu0
    %957 = vdwg.mxu0
    %v958 = vld [vmem:[%s0] sm:$0x3]
    %v959 = vlaneseq
    %v960 = vshrl.u32 %v959, 7
    %v961 = vadd.s32 %v960, 8
    %v962 = vlaneseq
    %v963 = vshrl.u32 %v962, 7
    %v964 = vsub.s32 0, %v963
    %v965 = vrot.slane %v958, %v964
    %vm966 = vcmp.eq.s32.totalorder %v960, %v965
    %vm967 = vcmp.eq.s32.totalorder %v961, %v965
    %v968 = vsel %vm966, 1, 0
    %v969 = vsel %vm967, 1, 0
    %v970 = vcvt.s32.f32 %v968
    %v971 = vcvt.s32.f32 %v969
    %v972 = vadd.s32 %v960, 16
    %v973 = vlaneseq
    %v974 = vshrl.u32 %v973, 7
    %v975 = vsub.s32 1, %v974
    %v976 = vrot.slane %v958, %v975
    %vm977 = vcmp.eq.s32.totalorder %v960, %v976
    %vm978 = vcmp.eq.s32.totalorder %v961, %v976
    %vm979 = vcmp.eq.s32.totalorder %v972, %v976
    %v980 = vsel %vm977, 1, 0
    %v981 = vsel %vm978, 1, 0
    %v982 = vsel %vm979, 1, 0
    %v983 = vcvt.s32.f32 %v980
    %v984 = vcvt.s32.f32 %v981
    %v985 = vcvt.s32.f32 %v982
    %v987 = vsel %vm273, %v751, 0
    %v990 = vsel %vm273, %v756, 0
    %v993 = vsel %vm273, %v945, 0
    %v996 = vsel %vm273, %v950, 0
    %v999 = vsel %vm273, %v955, 0
    %1001 = vmatprep.subr.mxu0 0.0
    %1002 = vmatpush1.xpose.msra.mxu0 %v993
    %1003 = vmatprep.subr.mxu0 0.0
    %1004 = vmatpush1.xpose.msra.mxu0 %v996
    %1005 = vmatprep.subr.mxu0 0.0
    %1006 = vmatpush1.xpose.msra.mxu0 %v999
    %1007 = vmatprep.subr.mxu0 0.0
    %1008 = vmatpush1.xpose.msra.mxu0 0.0
    %1009 = vmatprep.subr.mxu0 0.0
    %1010 = vmatpush1.xpose.msra.mxu0 0.0
    %1011 = vmatprep.subr.mxu0 0.0
    %1012 = vmatpush1.xpose.msra.mxu0 0.0
    %1013 = vmatprep.subr.mxu0 0.0
    %1014 = vmatpush1.xpose.msra.mxu0 0.0
    %1015 = vmatprep.subr.mxu0 0.0
    %1016 = vmatpush1.xpose.msra.mxu0 0.0
    %1017 = vmatprep.subr.mxu0 0.0
    %1018 = vmatpush1.xpose.msra.mxu0 0.0
    %1019 = vmatprep.subr.mxu0 0.0
    %1020 = vmatpush1.xpose.msra.mxu0 0.0
    %1021 = vmatprep.subr.mxu0 0.0
    %1022 = vmatpush1.xpose.msra.mxu0 0.0
    %1023 = vmatprep.subr.mxu0 0.0
    %1024 = vmatpush1.xpose.msra.mxu0 0.0
    %1025 = vmatprep.subr.mxu0 0.0
    %1026 = vmatpush1.xpose.msra.mxu0 0.0
    %1027 = vmatprep.subr.mxu0 0.0
    %1028 = vmatpush1.xpose.msra.mxu0 0.0
    %1029 = vmatprep.subr.mxu0 0.0
    %1030 = vmatpush1.xpose.msra.mxu0 0.0
    %1031 = vmatprep.subr.mxu0 0.0
    %1032 = vmatpush1.xpose.msra.mxu0 0.0
    %1033 = vmatprep.subr.mxu0 0.0
    %1034 = vmatpush1.xpose.msra.mxu0 0.0
    %1035 = vmatprep.subr.mxu0 0.0
    %1036 = vmatpush1.xpose.msra.mxu0 0.0
    %1037 = vmatprep.subr.mxu0 0.0
    %1038 = vmatpush1.xpose.msra.mxu0 0.0
    %1039 = vmatprep.subr.mxu0 0.0
    %1040 = vmatpush1.xpose.msra.mxu0 0.0
    %1041 = vmatprep.subr.mxu0 0.0
    %1042 = vmatpush1.xpose.msra.mxu0 0.0
    %1043 = vmatprep.subr.mxu0 0.0
    %1044 = vmatpush1.xpose.msra.mxu0 0.0
    %1045 = vmatprep.subr.mxu0 0.0
    %1046 = vmatpush1.xpose.msra.mxu0 0.0
    %1047 = vmatprep.subr.mxu0 0.0
    %1048 = vmatpush1.xpose.msra.mxu0 0.0
    %1049 = vmatprep.subr.mxu0 0.0
    %1050 = vmatpush1.xpose.msra.mxu0 0.0
    %1051 = vmatprep.subr.mxu0 0.0
    %1052 = vmatpush1.xpose.msra.mxu0 0.0
    %1053 = vmatprep.subr.mxu0 0.0
    %1054 = vmatpush1.xpose.msra.mxu0 0.0
    %1055 = vmatprep.subr.mxu0 0.0
    %1056 = vmatpush1.xpose.msra.mxu0 0.0
    %1057 = vmatprep.subr.mxu0 0.0
    %1058 = vmatpush1.xpose.msra.mxu0 0.0
    %1059 = vmatprep.subr.mxu0 0.0
    %1060 = vmatpush1.xpose.msra.mxu0 0.0
    %1061 = vmatprep.subr.mxu0 0.0
    %1062 = vmatpush1.xpose.msra.mxu0 0.0
    %1063 = vmatprep.subr.mxu0 0.0
    %1064 = vmatpush1.xpose.msra.mxu0 0.0
    %1065 = vmatprep.mubr.f32.mxu0 0.0
    %1066 = vmatmul.mubr.f32.gmra.mrb[0].mxu0 %v987
    %v1067 = vpop.f32.mrb[0].mxu0
    %v1068 = vadd.f32 0.0, %v1067
    %v1069 = vpop.f32.mrb[0].mxu0
    %1070 = vmatprep.mubr.f32.mxu0 0.0
    %1071 = vmatmul.mubr.f32.gmra.mrb[0].mxu0 %v990
    %v1072 = vpop.f32.mrb[0].mxu0
    %v1073 = vadd.f32 0.0, %v1072
    %v1074 = vpop.f32.mrb[0].mxu0
    %1075 = vdwg.mxu0
    %v1077 = vsel %vm183, %v1068, 0
    %v1080 = vsel %vm183, %v1073, 0
    %1082 = vmatprep.subr.mxu0 0.0
    %1083 = vmatpush1.msra.mxu0 %v983
    %1084 = vmatprep.subr.mxu0 0.0
    %1085 = vmatpush1.msra.mxu0 %v984
    %1086 = vmatprep.subr.mxu0 0.0
    %1087 = vmatpush1.msra.mxu0 %v985
    %1088 = vmatprep.subr.mxu0 0.0
    %1089 = vmatpush1.msra.mxu0 0.0
    %1090 = vmatprep.subr.mxu0 0.0
    %1091 = vmatpush1.msra.mxu0 0.0
    %1092 = vmatprep.subr.mxu0 0.0
    %1093 = vmatpush1.msra.mxu0 0.0
    %1094 = vmatprep.subr.mxu0 0.0
    %1095 = vmatpush1.msra.mxu0 0.0
    %1096 = vmatprep.subr.mxu0 0.0
    %1097 = vmatpush1.msra.mxu0 0.0
    %1098 = vmatprep.subr.mxu0 0.0
    %1099 = vmatpush1.msra.mxu0 0.0
    %1100 = vmatprep.subr.mxu0 0.0
    %1101 = vmatpush1.msra.mxu0 0.0
    %1102 = vmatprep.subr.mxu0 0.0
    %1103 = vmatpush1.msra.mxu0 0.0
    %1104 = vmatprep.subr.mxu0 0.0
    %1105 = vmatpush1.msra.mxu0 0.0
    %1106 = vmatprep.subr.mxu0 0.0
    %1107 = vmatpush1.msra.mxu0 0.0
    %1108 = vmatprep.subr.mxu0 0.0
    %1109 = vmatpush1.msra.mxu0 0.0
    %1110 = vmatprep.subr.mxu0 0.0
    %1111 = vmatpush1.msra.mxu0 0.0
    %1112 = vmatprep.subr.mxu0 0.0
    %1113 = vmatpush1.msra.mxu0 0.0
    %1114 = vmatprep.subr.mxu0 0.0
    %1115 = vmatpush1.msra.mxu0 0.0
    %1116 = vmatprep.subr.mxu0 0.0
    %1117 = vmatpush1.msra.mxu0 0.0
    %1118 = vmatprep.subr.mxu0 0.0
    %1119 = vmatpush1.msra.mxu0 0.0
    %1120 = vmatprep.subr.mxu0 0.0
    %1121 = vmatpush1.msra.mxu0 0.0
    %1122 = vmatprep.subr.mxu0 0.0
    %1123 = vmatpush1.msra.mxu0 0.0
    %1124 = vmatprep.subr.mxu0 0.0
    %1125 = vmatpush1.msra.mxu0 0.0
    %1126 = vmatprep.subr.mxu0 0.0
    %1127 = vmatpush1.msra.mxu0 0.0
    %1128 = vmatprep.subr.mxu0 0.0
    %1129 = vmatpush1.msra.mxu0 0.0
    %1130 = vmatprep.subr.mxu0 0.0
    %1131 = vmatpush1.msra.mxu0 0.0
    %1132 = vmatprep.subr.mxu0 0.0
    %1133 = vmatpush1.msra.mxu0 0.0
    %1134 = vmatprep.subr.mxu0 0.0
    %1135 = vmatpush1.msra.mxu0 0.0
    %1136 = vmatprep.subr.mxu0 0.0
    %1137 = vmatpush1.msra.mxu0 0.0
    %1138 = vmatprep.subr.mxu0 0.0
    %1139 = vmatpush1.msra.mxu0 0.0
    %1140 = vmatprep.subr.mxu0 0.0
    %1141 = vmatpush1.msra.mxu0 0.0
    %1142 = vmatprep.subr.mxu0 0.0
    %1143 = vmatpush1.msra.mxu0 0.0
    %1144 = vmatprep.subr.mxu0 0.0
    %1145 = vmatpush1.msra.mxu0 0.0
    %1146 = vmatprep.mubr.f32.mxu0 0.0
    %1147 = vmatmul.mubr.f32.gmra.mrb[0].mxu0 %v1077
    %v1148 = vpop.f32.mrb[0].mxu0
    %v1149 = vadd.f32 0.0, %v1148
    %v1150 = vpop.f32.mrb[0].mxu0
    %1151 = vmatprep.mubr.f32.mxu0 0.0
    %1152 = vmatmul.mubr.f32.gmra.mrb[0].mxu0 %v1080
    %v1153 = vpop.f32.mrb[0].mxu0
    %v1154 = vadd.f32 0.0, %v1153
    %v1155 = vpop.f32.mrb[0].mxu0
    %1156 = vdwg.mxu0
    %v1157 = vmul.f32 %v970, %v1149
    %v1158 = vmul.f32 %v971, %v1154
    %v1159 = vadd.f32 %v1157, %v1158
    %v1160 = vrot.slane %v1159, 4
    %v1161 = vadd.f32 %v1159, %v1160
    %v1162 = vrot.slane %v1161, 2
    %v1163 = vadd.f32 %v1161, %v1162
    %v1164 = vrot.slane %v1163, 1
    %v1165 = vadd.f32 %v1163, %v1164
    %1166 = vst [vmem:[#allocation2] sm:$0x1] %v1165
    // Predicated region
    $region66: #{tpu_custom_call.1} parent=1 // pred_check
      _
    $region67: #{tpu_custom_call.1} parent=1 // pred_check_branch
      %1168 = sbr.rel (0) target = $region69
    $region68: #{tpu_custom_call.1} parent=1 // pred_region
      %s1170 = ssub.s32 16, 16
      %1171 = vsyncadd [#allocation3], %s1170
      %s1173 = sshll.u32 [#allocation2], 4
      %s1174 = int_to_ptr.vmem [resolvable:$true] %s1173
      %1176 = dma.vmem_to_hbm [thread:$0]  %s1174, 16, %s16, [#allocation3]
    $region69: #{tpu_custom_call.1} parent=1 // pred_fallthru
      _
    // Predicated region
    $region70: #{tpu_custom_call.1} parent=1 // pred_check
      _
    $region71: #{tpu_custom_call.1} parent=1 // pred_check_branch
      %1178 = sbr.rel (0) target = $region73
    $region72: #{tpu_custom_call.1} parent=1 // pred_region
      %1179 = dma.done [#allocation3], 16
    $region73: #{tpu_custom_call.1} parent=1 // pred_fallthru
      _
    %1180 = vsyncpa [#allocation3], 1

</llo_original>
